<compile_context>
chip_gen: v7x
topology: tpu7x:2x2x1
jax: 0.10.0
libtpu: 0.0.40
codegen_flags: <defaults>
</compile_context>

<pallas_src>
import jax
import jax.numpy as jnp
from jax.experimental import pallas as pl
from jax.experimental.pallas import tpu as pltpu


def _channel_kernel(x_ref, w1t_ref, b1_ref, w2t_ref, b2_ref, o_ref):
    """One grid step: a (TB, C, L) slab of the NCL input."""
    x = x_ref[...].astype(jnp.float32)                     # (TB, C, L)

    # --- pooling over the length axis (lane-axis reduce) ---
    avg = jnp.mean(x, axis=2)                              # (TB, C)
    mx = jnp.max(x, axis=2)                                # (TB, C)

    w1t = w1t_ref[...]                                     # (C, H)
    b1 = b1_ref[...]                                       # (1, H)
    w2t = w2t_ref[...]                                     # (H, C)
    b2 = b2_ref[...]                                       # (1, C)

    # --- shared MLP, batched over TB rows. The second Linear is linear, so
    #     sigmoid(MLP(avg) + MLP(max)) == sigmoid((h_avg + h_max) @ W2^T + 2*b2)
    h_avg = jnp.maximum(
        jnp.dot(avg, w1t, preferred_element_type=jnp.float32) + b1, 0.0)   # (TB, H)
    h_max = jnp.maximum(
        jnp.dot(mx, w1t, preferred_element_type=jnp.float32) + b1, 0.0)    # (TB, H)
    logits = jnp.dot(h_avg + h_max, w2t,
                     preferred_element_type=jnp.float32) + 2.0 * b2        # (TB, C)
    gate = jax.nn.sigmoid(logits)                          # (TB, C)

    # --- channel-wise scaling, gate broadcast along L ---
    o_ref[...] = (gate[:, :, None] * x).astype(o_ref.dtype)


def _pick_batch_tile(B, C, L, itemsize, budget_bytes=2 * 1024 * 1024):
    """Largest divisor TB of B whose (TB, C, L) block fits the per-buffer VMEM
    budget, preferring >= 2 grid steps (v7x has two TensorCores)."""
    per_row = max(1, C * L * itemsize)
    best = 1
    for tb in range(1, B + 1):
        if tb * per_row > budget_bytes:
            break                       # tb only grows from here
        if B % tb != 0:
            continue
        if B // tb < 2 and B > 1:
            continue                    # keep both v7x cores busy
        best = tb
    return best


def channel_forward(x, w1, b1, w2, b2):
    """CBAM channel attention forward.

    x : (B, C, L)  NCL activations (f32 or bf16)
    w1: (H, C), b1: (H,)   first nn.Linear  (PyTorch (out_features, in_features))
    w2: (C, H), b2: (C,)   second nn.Linear
    Returns (B, C, L) with the same dtype as x.
    """
    B, C, L = x.shape
    H = w1.shape[0]

    # Kernel-friendly parameter layouts: transposed weights so the batched MLP
    # is (TB, C) @ (C, H) then (TB, H) @ (H, C); biases as (1, N) rows.
    w1t = jnp.asarray(w1, jnp.float32).T                   # (C, H)
    w2t = jnp.asarray(w2, jnp.float32).T                   # (H, C)
    b1r = jnp.asarray(b1, jnp.float32).reshape(1, H)
    b2r = jnp.asarray(b2, jnp.float32).reshape(1, C)

    tb = _pick_batch_tile(B, C, L, jnp.dtype(x.dtype).itemsize)
    # TODO(synk): add a two-pass L-tiled variant (running sum / running max with
    # pl.when init/finalize) for C*L slabs too large to keep resident in VMEM.
    grid = (B // tb,)

    return pl.pallas_call(
        _channel_kernel,
        out_shape=jax.ShapeDtypeStruct((B, C, L), x.dtype),
        grid_spec=pltpu.PrefetchScalarGridSpec(
            num_scalar_prefetch=0,
            grid=grid,
            in_specs=[
                pl.BlockSpec((tb, C, L), lambda b: (b, 0, 0)),   # x slab
                pl.BlockSpec((C, H), lambda b: (0, 0)),          # W1^T (resident)
                pl.BlockSpec((1, H), lambda b: (0, 0)),          # b1
                pl.BlockSpec((H, C), lambda b: (0, 0)),          # W2^T (resident)
                pl.BlockSpec((1, C), lambda b: (0, 0)),          # b2
            ],
            out_specs=pl.BlockSpec((tb, C, L), lambda b: (b, 0, 0)),
        ),
        compiler_params=pltpu.CompilerParams(
            dimension_semantics=("parallel",)),
    )(x, w1t, b1r, w2t, b2r)


def channel_reference(x, w1, b1, w2, b2):
    """Plain-JAX reference mirroring the PyTorch forward."""
    xf = x.astype(jnp.float32)
    avg = jnp.mean(xf, axis=2)                             # (B, C)
    mx = jnp.max(xf, axis=2)                               # (B, C)

    def mlp(v):                                            # v: (B, C)
        h = jnp.maximum(v @ w1.T + b1, 0.0)                # (B, H)
        return h @ w2.T + b2                               # (B, C)

    gate = jax.nn.sigmoid(mlp(avg) + mlp(mx))[:, :, None]  # (B, C, 1)
    return (gate * xf).astype(x.dtype)


if __name__ == "__main__":
    B, C, L = 8, 32, 128       # in_planes = 32; L multiple of 128 -> lane-dense I/O
    ratio = 16
    H = C // ratio             # hidden = 2

    key = jax.random.PRNGKey(0)
    kx, k1, k2, k3, k4 = jax.random.split(key, 5)

    x = jax.random.normal(kx, (B, C, L), dtype=jnp.float32)
    # nn.Linear weight layout: (out_features, in_features)
    w1 = jax.random.normal(k1, (H, C), dtype=jnp.float32) * 0.1
    b1 = jax.random.normal(k2, (H,), dtype=jnp.float32) * 0.1
    w2 = jax.random.normal(k3, (C, H), dtype=jnp.float32) * 0.1
    b2 = jax.random.normal(k4, (C,), dtype=jnp.float32) * 0.1

    # f32 path
    out = jax.block_until_ready(channel_forward(x, w1, b1, w2, b2))
    ref = channel_reference(x, w1, b1, w2, b2)
    assert out.shape == (B, C, L)
    assert jnp.allclose(out, ref, atol=1e-5, rtol=1e-5), "f32 mismatch vs reference"

    # bf16 I/O path (halves HBM bytes for this bandwidth-bound op)
    xb = x.astype(jnp.bfloat16)
    outb = jax.block_until_ready(channel_forward(xb, w1, b1, w2, b2))
    refb = channel_reference(xb, w1, b1, w2, b2)
    assert outb.dtype == jnp.bfloat16
    assert jnp.allclose(outb.astype(jnp.float32), refb.astype(jnp.float32),
                        atol=3e-2, rtol=3e-2), "bf16 mismatch vs reference"

    print("KERNEL_OK")
</pallas_src>

<mosaic_0001>
module attributes {stable_mosaic.version = 11 : i64} {
  func.func @_channel_kernel(%arg0: i32, %arg1: memref<4x32x128xf32, #tpu.memory_space<vmem>>, %arg2: memref<32x2xf32, #tpu.memory_space<vmem>>, %arg3: memref<1x2xf32, #tpu.memory_space<vmem>>, %arg4: memref<2x32xf32, #tpu.memory_space<vmem>>, %arg5: memref<1x32xf32, #tpu.memory_space<vmem>>, %arg6: memref<4x32x128xf32, #tpu.memory_space<vmem>>) attributes {dimension_semantics = [#tpu.dimension_semantics<parallel>], iteration_bounds = array<i64: 2>, scalar_prefetch = 0 : i64, scratch_operands = 0 : i64, tpu.core_type = #tpu.core_type<tc>, window_params = [{transform_indices = @transform_0, window_bounds = array<i64: 4, 32, 128>}, {pipeline_mode = #tpu.pipeline_mode<synchronous>, transform_indices = @transform_1, window_bounds = array<i64: 32, 2>}, {pipeline_mode = #tpu.pipeline_mode<synchronous>, transform_indices = @transform_2, window_bounds = array<i64: 1, 2>}, {pipeline_mode = #tpu.pipeline_mode<synchronous>, transform_indices = @transform_3, window_bounds = array<i64: 2, 32>}, {pipeline_mode = #tpu.pipeline_mode<synchronous>, transform_indices = @transform_4, window_bounds = array<i64: 1, 32>}, {transform_indices = @transform_5, window_bounds = array<i64: 4, 32, 128>}]} {
    %c0 = arith.constant 0 : index
    %c0_0 = arith.constant 0 : index
    %c0_1 = arith.constant 0 : index
    %0 = vector.load %arg1[%c0, %c0_0, %c0_1] : memref<4x32x128xf32, #tpu.memory_space<vmem>>, vector<4x32x128xf32>
    %cst = arith.constant dense<0.000000e+00> : vector<4x32xf32>
    %1 = vector.multi_reduction <add>, %0, %cst [2] : vector<4x32x128xf32> to vector<4x32xf32>
    %cst_2 = arith.constant 1.280000e+02 : f32
    %2 = vector.broadcast %cst_2 : f32 to vector<4x32xf32>
    %3 = arith.divf %1, %2 : vector<4x32xf32>
    %cst_3 = arith.constant dense<0xFF800000> : vector<4x32xf32>
    %4 = vector.multi_reduction <maximumf>, %0, %cst_3 [2] : vector<4x32x128xf32> to vector<4x32xf32>
    %c0_4 = arith.constant 0 : index
    %c0_5 = arith.constant 0 : index
    %5 = vector.load %arg2[%c0_4, %c0_5] : memref<32x2xf32, #tpu.memory_space<vmem>>, vector<32x2xf32>
    %c0_6 = arith.constant 0 : index
    %c0_7 = arith.constant 0 : index
    %6 = vector.load %arg3[%c0_6, %c0_7] : memref<1x2xf32, #tpu.memory_space<vmem>>, vector<1x2xf32>
    %c0_8 = arith.constant 0 : index
    %c0_9 = arith.constant 0 : index
    %7 = vector.load %arg4[%c0_8, %c0_9] : memref<2x32xf32, #tpu.memory_space<vmem>>, vector<2x32xf32>
    %c0_10 = arith.constant 0 : index
    %c0_11 = arith.constant 0 : index
    %8 = vector.load %arg5[%c0_10, %c0_11] : memref<1x32xf32, #tpu.memory_space<vmem>>, vector<1x32xf32>
    %cst_12 = arith.constant dense<0.000000e+00> : vector<4x2xf32>
    %9 = tpu.matmul %3, %5, %cst_12 {dimension_numbers = #tpu.dot_dimension_numbers<[1], [0], [0], [1], [0, 0, 1, 1], [], []>} : vector<4x32xf32>, vector<32x2xf32>, vector<4x2xf32> -> vector<4x2xf32>
    %10 = vector.broadcast %6 : vector<1x2xf32> to vector<4x2xf32>
    %11 = arith.addf %9, %10 : vector<4x2xf32>
    %cst_13 = arith.constant 0.000000e+00 : f32
    %12 = vector.broadcast %cst_13 : f32 to vector<4x2xf32>
    %13 = arith.maximumf %11, %12 : vector<4x2xf32>
    %cst_14 = arith.constant dense<0.000000e+00> : vector<4x2xf32>
    %14 = tpu.matmul %4, %5, %cst_14 {dimension_numbers = #tpu.dot_dimension_numbers<[1], [0], [0], [1], [0, 0, 1, 1], [], []>} : vector<4x32xf32>, vector<32x2xf32>, vector<4x2xf32> -> vector<4x2xf32>
    %15 = vector.broadcast %6 : vector<1x2xf32> to vector<4x2xf32>
    %16 = arith.addf %14, %15 : vector<4x2xf32>
    %cst_15 = arith.constant 0.000000e+00 : f32
    %17 = vector.broadcast %cst_15 : f32 to vector<4x2xf32>
    %18 = arith.maximumf %16, %17 : vector<4x2xf32>
    %19 = arith.addf %13, %18 : vector<4x2xf32>
    %cst_16 = arith.constant dense<0.000000e+00> : vector<4x32xf32>
    %20 = tpu.matmul %19, %7, %cst_16 {dimension_numbers = #tpu.dot_dimension_numbers<[1], [0], [0], [1], [0, 0, 1, 1], [], []>} : vector<4x2xf32>, vector<2x32xf32>, vector<4x32xf32> -> vector<4x32xf32>
    %cst_17 = arith.constant 2.000000e+00 : f32
    %21 = vector.broadcast %cst_17 : f32 to vector<1x32xf32>
    %22 = arith.mulf %21, %8 : vector<1x32xf32>
    %23 = vector.broadcast %22 : vector<1x32xf32> to vector<4x32xf32>
    %24 = arith.addf %20, %23 : vector<4x32xf32>
    %25 = arith.negf %24 : vector<4x32xf32>
    %26 = math.exp %25 : vector<4x32xf32>
    %cst_18 = arith.constant 1.000000e+00 : f32
    %27 = vector.broadcast %cst_18 : f32 to vector<4x32xf32>
    %28 = arith.addf %27, %26 : vector<4x32xf32>
    %29 = arith.divf %27, %28 : vector<4x32xf32>
    %30 = vector.shape_cast %29 : vector<4x32xf32> to vector<4x32x1xf32>
    %31 = vector.broadcast %30 : vector<4x32x1xf32> to vector<4x32x128xf32>
    %32 = arith.mulf %31, %0 : vector<4x32x128xf32>
    %c0_19 = arith.constant 0 : index
    %c0_20 = arith.constant 0 : index
    %c0_21 = arith.constant 0 : index
    %33 = vector.load %arg6[%c0_19, %c0_20, %c0_21] : memref<4x32x128xf32, #tpu.memory_space<vmem>>, vector<4x32x128xf32>
    tpu.vector_store %arg6[%c0_19, %c0_20, %c0_21], %32 {strides = array<i32>} : memref<4x32x128xf32, #tpu.memory_space<vmem>>, vector<4x32x128xf32>,
    return
  }
  func.func @transform_0(%arg0: i32) -> (i32, i32, i32) {
    %c0_i32 = arith.constant 0 : i32
    %c0_i32_0 = arith.constant 0 : i32
    %c0_i32_1 = arith.constant 0 : i32
    return %arg0, %c0_i32, %c0_i32_0 : i32, i32, i32
  }
  func.func @transform_1(%arg0: i32) -> (i32, i32) {
    %c0_i32 = arith.constant 0 : i32
    %c0_i32_0 = arith.constant 0 : i32
    %c0_i32_1 = arith.constant 0 : i32
    return %c0_i32, %c0_i32_0 : i32, i32
  }
  func.func @transform_2(%arg0: i32) -> (i32, i32) {
    %c0_i32 = arith.constant 0 : i32
    %c0_i32_0 = arith.constant 0 : i32
    %c0_i32_1 = arith.constant 0 : i32
    return %c0_i32, %c0_i32_0 : i32, i32
  }
  func.func @transform_3(%arg0: i32) -> (i32, i32) {
    %c0_i32 = arith.constant 0 : i32
    %c0_i32_0 = arith.constant 0 : i32
    %c0_i32_1 = arith.constant 0 : i32
    return %c0_i32, %c0_i32_0 : i32, i32
  }
  func.func @transform_4(%arg0: i32) -> (i32, i32) {
    %c0_i32 = arith.constant 0 : i32
    %c0_i32_0 = arith.constant 0 : i32
    %c0_i32_1 = arith.constant 0 : i32
    return %c0_i32, %c0_i32_0 : i32, i32
  }
  func.func @transform_5(%arg0: i32) -> (i32, i32, i32) {
    %c0_i32 = arith.constant 0 : i32
    %c0_i32_0 = arith.constant 0 : i32
    %c0_i32_1 = arith.constant 0 : i32
    return %arg0, %c0_i32, %c0_i32_0 : i32, i32, i32
  }
}

</mosaic_0001>

<llo_original>
// kernel: tpu_custom_call.1
$region0: #{tpu_custom_call.1}
  #allocation0 [shape = 'u32[]', space=smem, size = 0x4, offset = 0x4, fixed_abs, tag = 'smem constant byte address 0x4 - core index']
  #allocation1 [shape = 'u32[144,128]{1,0:T(1,128)}', space=vmem, size = 0x12000, scoped, tag = 'internal scratch']
  %s0 = inlined_call_operand.hbm [shape: f32[8,32,128], index: 0, kind: input, shape index: {}]
  %s1 = inlined_call_operand.vmem [shape: f32[32,2], index: 1, kind: input, shape index: {}]
  %s2 = inlined_call_operand.vmem [shape: f32[1,2], index: 2, kind: input, shape index: {}]
  %s3 = inlined_call_operand.vmem [shape: f32[2,32], index: 3, kind: input, shape index: {}]
  %s4 = inlined_call_operand.vmem [shape: f32[1,32], index: 4, kind: input, shape index: {}]
  %s5 = inlined_call_operand.hbm [shape: f32[8,32,128], index: 5, kind: output, shape index: {}]
  %s6 = sld [smem:[#allocation0]]
  $region57: #{tpu_custom_call.1} parent=0
    _
  %s8 = ssub.s32 1, %s6
  %s9 = scalar_select 0, %s8, %s6
  $region1: #{tpu_custom_call.1} parent=0
    #allocation2 [shape = 'u8[131072]{0}', space=vmem, size = 0x20000, scoped, tag = 'input window, operand 0']
    #allocation3 [shape = 's32[2]{0}', space=sflag, size = 0x8, scoped, tag = 'scoped memory for tpu_custom_call.1']
    #allocation4 [shape = 's32[2]{0}', space=sflag, size = 0x8, scoped, tag = 'scoped memory for tpu_custom_call.1']
    #allocation5 [shape = 'u8[131072]{0}', space=vmem, size = 0x20000, scoped, tag = 'output window, operand 0']
    %10 = vsyncpa [#allocation3], 0
    %s11 = scalar_lea.sflag [#allocation3], 1
    %12 = vsyncpa %s11, 0
    %13 = vsyncpa [#allocation4], 0
    %s14 = scalar_lea.sflag [#allocation4], 1
    %15 = vsyncpa %s14, 0
    loop: start=0, step=1, limit=4
    $region2: #{tpu_custom_call.1} parent=1 // loop_pre_header
      _
    $region3: #{tpu_custom_call.1} parent=1 // loop_header
      %s17 = sphi 0, %s21
      %p18 = scmp.ge.s32.totalorder %s17, 4
      %s27 = sphi 0, %s29
      %s30 = sphi 0, %s27
      %s31 = sphi 0, %s30
      %s47 = sphi 0, %s31
      %s51 = sphi 0, %s51
      %s53 = sphi 0, %s51
      %s54 = sphi 0, %s53
      %s68 = sphi 0, %s54
      %s72 = sphi 0, %s72
      %s74 = sphi 0, %s72
      %s75 = sphi 0, %s74
      %s89 = sphi 0, %s75
      %s93 = sphi 0, %s93
      %s95 = sphi 0, %s93
      %s96 = sphi 0, %s95
      %s110 = sphi 0, %s96
      %s114 = sphi 0, %s114
      %s116 = sphi 0, %s114
      %s117 = sphi 0, %s116
      %s131 = sphi 0, %s117
      %s137 = sphi 0, %s139
      %s140 = sphi 0, %s137
      %s141 = sphi 0, %s140
      %s157 = sphi 0, %s141
    $region4: #{tpu_custom_call.1} parent=1 // loop_header_branch
      %20 = sbr.rel (%p18) target = $region8
    $region5: #{tpu_custom_call.1} parent=1 // loop_body
      %s22 = ssub.s32 %s17, 1
      %s23 = ssub.s32 %s17, 2
      %s24 = sadd.s32 %s17, 1
      %s25 = ssub.s32 %s17, %s24
      %p26 = scmp.eq.s32.totalorder %s25, 0
      %s28 = sadd.s32 %s27, 1
      %s29 = scalar_select %p26, %s27, %s28
      %p32 = pneg %p26
      %p33 = scmp.eq.s32.totalorder %s17, 1
      %p34 = por %p32, %p33
      %p35 = scmp.ne.s32.totalorder %s27, %s30
      %p36 = scmp.eq.s32.totalorder %s17, 0
      %p37 = por %p35, %p36
      %p38 = scmp.ne.s32.totalorder %s27, %s30
      %p39 = scmp.eq.s32.totalorder %s22, 1
      %p40 = por %p38, %p39
      %p41 = scmp.ne.s32.totalorder %s30, %s31
      %p42 = scmp.eq.s32.totalorder %s22, 0
      %p43 = por %p41, %p42
      %p44 = scmp.ne.s32.totalorder %s30, %s31
      %p45 = scmp.eq.s32.totalorder %s23, 1
      %p46 = por %p44, %p45
      %p48 = scmp.ne.s32.totalorder %s31, %s47
      %p49 = scmp.eq.s32.totalorder %s23, 0
      %p50 = por %p48, %p49
      %s52 = sadd.s32 %s51, 1
      %p55 = scmp.eq.s32.totalorder %s17, 1
      %p56 = scmp.ne.s32.totalorder %s51, %s53
      %p57 = scmp.eq.s32.totalorder %s17, 0
      %p58 = por %p56, %p57
      %p59 = scmp.ne.s32.totalorder %s51, %s53
      %p60 = scmp.eq.s32.totalorder %s22, 1
      %p61 = por %p59, %p60
      %p62 = scmp.ne.s32.totalorder %s53, %s54
      %p63 = scmp.eq.s32.totalorder %s22, 0
      %p64 = por %p62, %p63
      %p65 = scmp.ne.s32.totalorder %s53, %s54
      %p66 = scmp.eq.s32.totalorder %s23, 1
      %p67 = por %p65, %p66
      %p69 = scmp.ne.s32.totalorder %s54, %s68
      %p70 = scmp.eq.s32.totalorder %s23, 0
      %p71 = por %p69, %p70
      %s73 = sadd.s32 %s72, 1
      %p76 = scmp.eq.s32.totalorder %s17, 1
      %p77 = scmp.ne.s32.totalorder %s72, %s74
      %p78 = scmp.eq.s32.totalorder %s17, 0
      %p79 = por %p77, %p78
      %p80 = scmp.ne.s32.totalorder %s72, %s74
      %p81 = scmp.eq.s32.totalorder %s22, 1
      %p82 = por %p80, %p81
      %p83 = scmp.ne.s32.totalorder %s74, %s75
      %p84 = scmp.eq.s32.totalorder %s22, 0
      %p85 = por %p83, %p84
      %p86 = scmp.ne.s32.totalorder %s74, %s75
      %p87 = scmp.eq.s32.totalorder %s23, 1
      %p88 = por %p86, %p87
      %p90 = scmp.ne.s32.totalorder %s75, %s89
      %p91 = scmp.eq.s32.totalorder %s23, 0
      %p92 = por %p90, %p91
      %s94 = sadd.s32 %s93, 1
      %p97 = scmp.eq.s32.totalorder %s17, 1
      %p98 = scmp.ne.s32.totalorder %s93, %s95
      %p99 = scmp.eq.s32.totalorder %s17, 0
      %p100 = por %p98, %p99
      %p101 = scmp.ne.s32.totalorder %s93, %s95
      %p102 = scmp.eq.s32.totalorder %s22, 1
      %p103 = por %p101, %p102
      %p104 = scmp.ne.s32.totalorder %s95, %s96
      %p105 = scmp.eq.s32.totalorder %s22, 0
      %p106 = por %p104, %p105
      %p107 = scmp.ne.s32.totalorder %s95, %s96
      %p108 = scmp.eq.s32.totalorder %s23, 1
      %p109 = por %p107, %p108
      %p111 = scmp.ne.s32.totalorder %s96, %s110
      %p112 = scmp.eq.s32.totalorder %s23, 0
      %p113 = por %p111, %p112
      %s115 = sadd.s32 %s114, 1
      %p118 = scmp.eq.s32.totalorder %s17, 1
      %p119 = scmp.ne.s32.totalorder %s114, %s116
      %p120 = scmp.eq.s32.totalorder %s17, 0
      %p121 = por %p119, %p120
      %p122 = scmp.ne.s32.totalorder %s114, %s116
      %p123 = scmp.eq.s32.totalorder %s22, 1
      %p124 = por %p122, %p123
      %p125 = scmp.ne.s32.totalorder %s116, %s117
      %p126 = scmp.eq.s32.totalorder %s22, 0
      %p127 = por %p125, %p126
      %p128 = scmp.ne.s32.totalorder %s116, %s117
      %p129 = scmp.eq.s32.totalorder %s23, 1
      %p130 = por %p128, %p129
      %p132 = scmp.ne.s32.totalorder %s117, %s131
      %p133 = scmp.eq.s32.totalorder %s23, 0
      %p134 = por %p132, %p133
      %s135 = ssub.s32 %s17, %s24
      %p136 = scmp.eq.s32.totalorder %s135, 0
      %s138 = sadd.s32 %s137, 1
      %s139 = scalar_select %p136, %s137, %s138
      %p142 = pneg %p136
      %p143 = scmp.eq.s32.totalorder %s17, 1
      %p144 = por %p142, %p143
      %p145 = scmp.ne.s32.totalorder %s137, %s140
      %p146 = scmp.eq.s32.totalorder %s17, 0
      %p147 = por %p145, %p146
      %p148 = scmp.ne.s32.totalorder %s137, %s140
      %p149 = scmp.eq.s32.totalorder %s22, 1
      %p150 = por %p148, %p149
      %p151 = scmp.ne.s32.totalorder %s140, %s141
      %p152 = scmp.eq.s32.totalorder %s22, 0
      %p153 = por %p151, %p152
      %p154 = scmp.ne.s32.totalorder %s140, %s141
      %p155 = scmp.eq.s32.totalorder %s23, 1
      %p156 = por %p154, %p155
      %p158 = scmp.ne.s32.totalorder %s141, %s157
      %p159 = scmp.eq.s32.totalorder %s23, 0
      %p160 = por %p158, %p159
      %p161 = scmp.le.s32.totalorder 1, %s17
      %p162 = scmp.lt.s32.totalorder %s17, 3
      %p163 = pnand %p161, %p162
      %p164 = pneg %p163
      // Predicated region
      $region9: #{tpu_custom_call.1} parent=5 // pred_check
        _
      $region10: #{tpu_custom_call.1} parent=5 // pred_check_branch
        %166 = sbr.rel (%p163) target = $region12
      $region11: #{tpu_custom_call.1} parent=5 // pred_region
        %s167 = ssub.s32 %s17, 1
        // Predicated region
        $region13: #{tpu_custom_call.1} parent=11 // pred_check
          %p168 = pneg %p64
        $region14: #{tpu_custom_call.1} parent=11 // pred_check_branch
          %170 = sbr.rel (%p168) target = $region16
        $region15: #{tpu_custom_call.1} parent=11 // pred_region
          _
        $region16: #{tpu_custom_call.1} parent=11 // pred_fallthru
          _
        // Predicated region
        $region17: #{tpu_custom_call.1} parent=11 // pred_check
          %p171 = pneg %p85
        $region18: #{tpu_custom_call.1} parent=11 // pred_check_branch
          %173 = sbr.rel (%p171) target = $region20
        $region19: #{tpu_custom_call.1} parent=11 // pred_region
          _
        $region20: #{tpu_custom_call.1} parent=11 // pred_fallthru
          _
        // Predicated region
        $region21: #{tpu_custom_call.1} parent=11 // pred_check
          %p174 = pneg %p106
        $region22: #{tpu_custom_call.1} parent=11 // pred_check_branch
          %176 = sbr.rel (%p174) target = $region24
        $region23: #{tpu_custom_call.1} parent=11 // pred_region
          _
        $region24: #{tpu_custom_call.1} parent=11 // pred_fallthru
          _
        // Predicated region
        $region25: #{tpu_custom_call.1} parent=11 // pred_check
          %p177 = pneg %p127
        $region26: #{tpu_custom_call.1} parent=11 // pred_check_branch
          %179 = sbr.rel (%p177) target = $region28
        $region27: #{tpu_custom_call.1} parent=11 // pred_region
          _
        $region28: #{tpu_custom_call.1} parent=11 // pred_fallthru
          _
      $region12: #{tpu_custom_call.1} parent=5 // pred_fallthru
        _
      %p180 = scmp.lt.s32.totalorder %s17, 2
      // Predicated region
      $region29: #{tpu_custom_call.1} parent=5 // pred_check
        %p181 = pneg %p180
      $region30: #{tpu_custom_call.1} parent=5 // pred_check_branch
        %183 = sbr.rel (%p181) target = $region32
      $region31: #{tpu_custom_call.1} parent=5 // pred_region
        // Predicated region
        $region33: #{tpu_custom_call.1} parent=31 // pred_check
          %p184 = pneg %p37
        $region34: #{tpu_custom_call.1} parent=31 // pred_check_branch
          %186 = sbr.rel (%p184) target = $region36
        $region35: #{tpu_custom_call.1} parent=31 // pred_region
          %s187 = sand.u32 %s27, 1
          %s188 = scalar_lea.sflag [#allocation3], %s187
          %s189 = sand.u32 %s27, 1
          %s190 = smul.addr %s189, 128
          %s191 = scalar_lea.vmem [#allocation2], %s190
          %s192 = smul.u32 4, %s17
          %s194 = ssub.s32 2048, 2048
          %195 = vsyncadd %s188, %s194
          %s196 = smul.addr %s192, 4
          %s197 = smul.addr %s196, 128
          %s198 = scalar_lea.hbm %s0, %s197
          %s199 = sshll.u32 %s191, 4
          %s200 = int_to_ptr.vmem [resolvable:$true] %s199
          %205 = dma.hbm_to_vmem [thread:$0]  %s198, 2048, %s200, %s188, 128, 128, 8
        $region36: #{tpu_custom_call.1} parent=31 // pred_fallthru
          _
      $region32: #{tpu_custom_call.1} parent=5 // pred_fallthru
        _
      %p206 = scmp.le.s32.totalorder 1, %s17
      %p207 = scmp.lt.s32.totalorder %s17, 3
      %p208 = pnand %p206, %p207
      %p209 = pneg %p208
      // Predicated region
      $region37: #{tpu_custom_call.1} parent=5 // pred_check
        _
      $region38: #{tpu_custom_call.1} parent=5 // pred_check_branch
        %211 = sbr.rel (%p208) target = $region40
      $region39: #{tpu_custom_call.1} parent=5 // pred_region
        %s212 = ssub.s32 %s17, 1
        %s213 = sand.u32 %s30, 1
        %s214 = scalar_lea.sflag [#allocation3], %s213
        %s215 = sand.u32 %s30, 1
        %s216 = smul.addr %s215, 128
        %s217 = scalar_lea.vmem [#allocation2], %s216
        // Predicated region
        $region41: #{tpu_custom_call.1} parent=39 // pred_check
          %p218 = pneg %p43
        $region42: #{tpu_custom_call.1} parent=39 // pred_check_branch
          %220 = sbr.rel (%p218) target = $region44
        $region43: #{tpu_custom_call.1} parent=39 // pred_region
          %221 = dma.done %s214, 2048
        $region44: #{tpu_custom_call.1} parent=39 // pred_fallthru
          _
        %s222 = sand.u32 %s30, 1
        %s223 = scalar_lea.sflag [#allocation3], %s222
        %s224 = sand.u32 %s30, 1
        %s225 = smul.addr %s224, 128
        %s226 = scalar_lea.vmem [#allocation2], %s225
        %p227 = pneg %p43
        %p228 = pneg %p40
        %p229 = pneg %p64
        %p230 = pneg %p61
        %p231 = pneg %p85
        %p232 = pneg %p82
        %p233 = pneg %p106
        %p234 = pneg %p103
        %p235 = pneg %p127
        %p236 = pneg %p124
        %p237 = pneg %p153
        %p238 = pneg %p150
        %s239 = sand.u32 %s140, 1
        %s240 = scalar_lea.sflag [#allocation4], %s239
        %s241 = sand.u32 %s140, 1
        %s242 = smul.addr %s241, 128
        %s243 = scalar_lea.vmem [#allocation5], %s242
        %s244 = smul.u32 4, %s22
        %s245 = smul.u32 4, %s22
        %v246 = vld [vmem:[%s217] sm:$0xff]
        %v247 = vld [vmem:[%s217 + $0x8] sm:$0xff]
        %v248 = vld [vmem:[%s217 + $0x10] sm:$0xff]
        %v249 = vld [vmem:[%s217 + $0x18] sm:$0xff]
        %v250 = vld [vmem:[%s217 + $0x20] sm:$0xff]
        %v251 = vld [vmem:[%s217 + $0x28] sm:$0xff]
        %v252 = vld [vmem:[%s217 + $0x30] sm:$0xff]
        %v253 = vld [vmem:[%s217 + $0x38] sm:$0xff]
        %v254 = vld [vmem:[%s217 + $0x40] sm:$0xff]
        %v255 = vld [vmem:[%s217 + $0x48] sm:$0xff]
        %v256 = vld [vmem:[%s217 + $0x50] sm:$0xff]
        %v257 = vld [vmem:[%s217 + $0x58] sm:$0xff]
        %v258 = vld [vmem:[%s217 + $0x60] sm:$0xff]
        %v259 = vld [vmem:[%s217 + $0x68] sm:$0xff]
        %v260 = vld [vmem:[%s217 + $0x70] sm:$0xff]
        %v261 = vld [vmem:[%s217 + $0x78] sm:$0xff]
        %262 = vadd.xlane.f32.xlu0 %v246
        %v263 = vpop.xlane.xlu0 %262
        %264 = vadd.xlane.f32.xlu0 %v247
        %v265 = vpop.xlane.xlu0 %264
        %266 = vadd.xlane.f32.xlu0 %v248
        %v267 = vpop.xlane.xlu0 %266
        %268 = vadd.xlane.f32.xlu0 %v249
        %v269 = vpop.xlane.xlu0 %268
        %270 = vadd.xlane.f32.xlu0 %v250
        %v271 = vpop.xlane.xlu0 %270
        %272 = vadd.xlane.f32.xlu0 %v251
        %v273 = vpop.xlane.xlu0 %272
        %274 = vadd.xlane.f32.xlu0 %v252
        %v275 = vpop.xlane.xlu0 %274
        %276 = vadd.xlane.f32.xlu0 %v253
        %v277 = vpop.xlane.xlu0 %276
        %278 = vadd.xlane.f32.xlu0 %v254
        %v279 = vpop.xlane.xlu0 %278
        %280 = vadd.xlane.f32.xlu0 %v255
        %v281 = vpop.xlane.xlu0 %280
        %282 = vadd.xlane.f32.xlu0 %v256
        %v283 = vpop.xlane.xlu0 %282
        %284 = vadd.xlane.f32.xlu0 %v257
        %v285 = vpop.xlane.xlu0 %284
        %286 = vadd.xlane.f32.xlu0 %v258
        %v287 = vpop.xlane.xlu0 %286
        %288 = vadd.xlane.f32.xlu0 %v259
        %v289 = vpop.xlane.xlu0 %288
        %290 = vadd.xlane.f32.xlu0 %v260
        %v291 = vpop.xlane.xlu0 %290
        %292 = vadd.xlane.f32.xlu0 %v261
        %v293 = vpop.xlane.xlu0 %292
        %v294 = vrcp.pop 128.0
        %v295 = vmul.f32 %v263, %v294
        %v296 = vmul.f32 %v265, %v294
        %v297 = vmul.f32 %v267, %v294
        %v298 = vmul.f32 %v269, %v294
        %v299 = vmul.f32 %v271, %v294
        %v300 = vmul.f32 %v273, %v294
        %v301 = vmul.f32 %v275, %v294
        %v302 = vmul.f32 %v277, %v294
        %v303 = vmul.f32 %v279, %v294
        %v304 = vmul.f32 %v281, %v294
        %v305 = vmul.f32 %v283, %v294
        %v306 = vmul.f32 %v285, %v294
        %v307 = vmul.f32 %v287, %v294
        %v308 = vmul.f32 %v289, %v294
        %v309 = vmul.f32 %v291, %v294
        %v310 = vmul.f32 %v293, %v294
        %311 = vmax.xlane.f32.xlu0 %v246
        %v312 = vpop.xlane.xlu0 %311
        %313 = vmax.xlane.f32.xlu0 %v247
        %v314 = vpop.xlane.xlu0 %313
        %315 = vmax.xlane.f32.xlu0 %v248
        %v316 = vpop.xlane.xlu0 %315
        %317 = vmax.xlane.f32.xlu0 %v249
        %v318 = vpop.xlane.xlu0 %317
        %319 = vmax.xlane.f32.xlu0 %v250
        %v320 = vpop.xlane.xlu0 %319
        %321 = vmax.xlane.f32.xlu0 %v251
        %v322 = vpop.xlane.xlu0 %321
        %323 = vmax.xlane.f32.xlu0 %v252
        %v324 = vpop.xlane.xlu0 %323
        %325 = vmax.xlane.f32.xlu0 %v253
        %v326 = vpop.xlane.xlu0 %325
        %327 = vmax.xlane.f32.xlu0 %v254
        %v328 = vpop.xlane.xlu0 %327
        %329 = vmax.xlane.f32.xlu0 %v255
        %v330 = vpop.xlane.xlu0 %329
        %331 = vmax.xlane.f32.xlu0 %v256
        %v332 = vpop.xlane.xlu0 %331
        %333 = vmax.xlane.f32.xlu0 %v257
        %v334 = vpop.xlane.xlu0 %333
        %335 = vmax.xlane.f32.xlu0 %v258
        %v336 = vpop.xlane.xlu0 %335
        %337 = vmax.xlane.f32.xlu0 %v259
        %v338 = vpop.xlane.xlu0 %337
        %339 = vmax.xlane.f32.xlu0 %v260
        %v340 = vpop.xlane.xlu0 %339
        %341 = vmax.xlane.f32.xlu0 %v261
        %v342 = vpop.xlane.xlu0 %341
        %v343 = vld [vmem:[%s1] sm:$0xff]
        %v344 = vld [vmem:[%s1 + $0x8] sm:$0xff]
        %v345 = vld [vmem:[%s1 + $0x10] sm:$0xff]
        %v346 = vld [vmem:[%s1 + $0x18] sm:$0xff]
        %v347 = vld [vmem:[%s2] sm:$0x1]
        %v348 = vld [vmem:[%s3] sm:$0x3]
        %v349 = vld [vmem:[%s4] sm:$0x1]
        %v351 = vlaneseq
        %v352 = vshrl.u32 %v351, 7
        %v353 = vsub.s32 0, %v352
        %v354 = vrot.slane %v347, %v353
        %v372 = vlaneseq
        %v373 = vand.u32 %v372, 127
        %v374 = vlaneseq
        %v375 = vshrl.u32 %v374, 7
        %v376 = vsub.s32 %v373, %v375
        %v377 = vrot.slane %v295, %v376
        %v378 = vadd.s32 %v373, 4294967288
        %v379 = vlaneseq
        %v380 = vshrl.u32 %v379, 7
        %v381 = vsub.s32 %v378, %v380
        %v382 = vrot.slane %v296, %v381
        %vm383 = vcmask 130112
        %v384 = vsel %vm383, %v382, %v377
        %v385 = vadd.s32 %v373, 4294967280
        %v386 = vlaneseq
        %v387 = vshrl.u32 %v386, 7
        %v388 = vsub.s32 %v385, %v387
        %v389 = vrot.slane %v297, %v388
        %vm390 = vcmask 195712
        %v391 = vsel %vm390, %v389, %v384
        %v392 = vadd.s32 %v373, 4294967272
        %v393 = vlaneseq
        %v394 = vshrl.u32 %v393, 7
        %v395 = vsub.s32 %v392, %v394
        %v396 = vrot.slane %v298, %v395
        %vm397 = vcmask 261312
        %v398 = vsel %vm397, %v396, %v391
        %v399 = vlaneseq
        %v400 = vshrl.u32 %v399, 7
        %v401 = vsub.s32 %v373, %v400
        %v402 = vrot.slane %v299, %v401
        %v403 = vlaneseq
        %v404 = vshrl.u32 %v403, 7
        %v405 = vsub.s32 %v378, %v404
        %v406 = vrot.slane %v300, %v405
        %v407 = vsel %vm383, %v406, %v402
        %v408 = vlaneseq
        %v409 = vshrl.u32 %v408, 7
        %v410 = vsub.s32 %v385, %v409
        %v411 = vrot.slane %v301, %v410
        %v412 = vsel %vm390, %v411, %v407
        %v413 = vlaneseq
        %v414 = vshrl.u32 %v413, 7
        %v415 = vsub.s32 %v392, %v414
        %v416 = vrot.slane %v302, %v415
        %v417 = vsel %vm397, %v416, %v412
        %v418 = vlaneseq
        %v419 = vshrl.u32 %v418, 7
        %v420 = vsub.s32 %v373, %v419
        %v421 = vrot.slane %v303, %v420
        %v422 = vlaneseq
        %v423 = vshrl.u32 %v422, 7
        %v424 = vsub.s32 %v378, %v423
        %v425 = vrot.slane %v304, %v424
        %v426 = vsel %vm383, %v425, %v421
        %v427 = vlaneseq
        %v428 = vshrl.u32 %v427, 7
        %v429 = vsub.s32 %v385, %v428
        %v430 = vrot.slane %v305, %v429
        %v431 = vsel %vm390, %v430, %v426
        %v432 = vlaneseq
        %v433 = vshrl.u32 %v432, 7
        %v434 = vsub.s32 %v392, %v433
        %v435 = vrot.slane %v306, %v434
        %v436 = vsel %vm397, %v435, %v431
        %v437 = vlaneseq
        %v438 = vshrl.u32 %v437, 7
        %v439 = vsub.s32 %v373, %v438
        %v440 = vrot.slane %v307, %v439
        %v441 = vlaneseq
        %v442 = vshrl.u32 %v441, 7
        %v443 = vsub.s32 %v378, %v442
        %v444 = vrot.slane %v308, %v443
        %v445 = vsel %vm383, %v444, %v440
        %v446 = vlaneseq
        %v447 = vshrl.u32 %v446, 7
        %v448 = vsub.s32 %v385, %v447
        %v449 = vrot.slane %v309, %v448
        %v450 = vsel %vm390, %v449, %v445
        %v451 = vlaneseq
        %v452 = vshrl.u32 %v451, 7
        %v453 = vsub.s32 %v392, %v452
        %v454 = vrot.slane %v310, %v453
        %v455 = vsel %vm397, %v454, %v450
        %vm456 = vcmask 1041409
        %v457 = vsel %vm456, %v417, %v398
        %vm458 = vcmask 1042434
        %v459 = vsel %vm458, %v436, %v457
        %vm460 = vcmask 1043459
        %v461 = vsel %vm460, %v455, %v459
        %vm462 = vcmask 261120
        %v463 = vsel %vm462, %v461, 0
        %465 = vmatprep.subr.mxu0 0.0
        %466 = vmatpush1.msra.mxu0 %v343
        %467 = vmatprep.subr.mxu0 0.0
        %468 = vmatpush1.msra.mxu0 %v344
        %469 = vmatprep.subr.mxu0 0.0
        %470 = vmatpush1.msra.mxu0 %v345
        %471 = vmatprep.subr.mxu0 0.0
        %472 = vmatpush1.msra.mxu0 %v346
        %473 = vmatprep.subr.mxu0 0.0
        %474 = vmatpush1.msra.mxu0 0.0
        %475 = vmatprep.subr.mxu0 0.0
        %476 = vmatpush1.msra.mxu0 0.0
        %477 = vmatprep.subr.mxu0 0.0
        %478 = vmatpush1.msra.mxu0 0.0
        %479 = vmatprep.subr.mxu0 0.0
        %480 = vmatpush1.msra.mxu0 0.0
        %481 = vmatprep.subr.mxu0 0.0
        %482 = vmatpush1.msra.mxu0 0.0
        %483 = vmatprep.subr.mxu0 0.0
        %484 = vmatpush1.msra.mxu0 0.0
        %485 = vmatprep.subr.mxu0 0.0
        %486 = vmatpush1.msra.mxu0 0.0
        %487 = vmatprep.subr.mxu0 0.0
        %488 = vmatpush1.msra.mxu0 0.0
        %489 = vmatprep.subr.mxu0 0.0
        %490 = vmatpush1.msra.mxu0 0.0
        %491 = vmatprep.subr.mxu0 0.0
        %492 = vmatpush1.msra.mxu0 0.0
        %493 = vmatprep.subr.mxu0 0.0
        %494 = vmatpush1.msra.mxu0 0.0
        %495 = vmatprep.subr.mxu0 0.0
        %496 = vmatpush1.msra.mxu0 0.0
        %497 = vmatprep.subr.mxu0 0.0
        %498 = vmatpush1.msra.mxu0 0.0
        %499 = vmatprep.subr.mxu0 0.0
        %500 = vmatpush1.msra.mxu0 0.0
        %501 = vmatprep.subr.mxu0 0.0
        %502 = vmatpush1.msra.mxu0 0.0
        %503 = vmatprep.subr.mxu0 0.0
        %504 = vmatpush1.msra.mxu0 0.0
        %505 = vmatprep.subr.mxu0 0.0
        %506 = vmatpush1.msra.mxu0 0.0
        %507 = vmatprep.subr.mxu0 0.0
        %508 = vmatpush1.msra.mxu0 0.0
        %509 = vmatprep.subr.mxu0 0.0
        %510 = vmatpush1.msra.mxu0 0.0
        %511 = vmatprep.subr.mxu0 0.0
        %512 = vmatpush1.msra.mxu0 0.0
        %513 = vmatprep.subr.mxu0 0.0
        %514 = vmatpush1.msra.mxu0 0.0
        %515 = vmatprep.subr.mxu0 0.0
        %516 = vmatpush1.msra.mxu0 0.0
        %517 = vmatprep.subr.mxu0 0.0
        %518 = vmatpush1.msra.mxu0 0.0
        %519 = vmatprep.subr.mxu0 0.0
        %520 = vmatpush1.msra.mxu0 0.0
        %521 = vmatprep.subr.mxu0 0.0
        %522 = vmatpush1.msra.mxu0 0.0
        %523 = vmatprep.subr.mxu0 0.0
        %524 = vmatpush1.msra.mxu0 0.0
        %525 = vmatprep.subr.mxu0 0.0
        %526 = vmatpush1.msra.mxu0 0.0
        %527 = vmatprep.subr.mxu0 0.0
        %528 = vmatpush1.msra.mxu0 0.0
        %529 = vmatprep.mubr.f32.mxu0 0.0
        %530 = vmatmul.mubr.f32.gmra.mrb[0].mxu0 %v463
        %v531 = vpop.f32.mrb[0].mxu0
        %v532 = vadd.f32 %v354, %v531
        %v533 = vpop.f32.mrb[0].mxu0
        %534 = vdwg.mxu0
        %v535 = vmax.f32 %v532, 0.0
        %v552 = vlaneseq
        %v553 = vshrl.u32 %v552, 7
        %v554 = vsub.s32 %v373, %v553
        %v555 = vrot.slane %v312, %v554
        %v556 = vlaneseq
        %v557 = vshrl.u32 %v556, 7
        %v558 = vsub.s32 %v378, %v557
        %v559 = vrot.slane %v314, %v558
        %v560 = vsel %vm383, %v559, %v555
        %v561 = vlaneseq
        %v562 = vshrl.u32 %v561, 7
        %v563 = vsub.s32 %v385, %v562
        %v564 = vrot.slane %v316, %v563
        %v565 = vsel %vm390, %v564, %v560
        %v566 = vlaneseq
        %v567 = vshrl.u32 %v566, 7
        %v568 = vsub.s32 %v392, %v567
        %v569 = vrot.slane %v318, %v568
        %v570 = vsel %vm397, %v569, %v565
        %v571 = vlaneseq
        %v572 = vshrl.u32 %v571, 7
        %v573 = vsub.s32 %v373, %v572
        %v574 = vrot.slane %v320, %v573
        %v575 = vlaneseq
        %v576 = vshrl.u32 %v575, 7
        %v577 = vsub.s32 %v378, %v576
        %v578 = vrot.slane %v322, %v577
        %v579 = vsel %vm383, %v578, %v574
        %v580 = vlaneseq
        %v581 = vshrl.u32 %v580, 7
        %v582 = vsub.s32 %v385, %v581
        %v583 = vrot.slane %v324, %v582
        %v584 = vsel %vm390, %v583, %v579
        %v585 = vlaneseq
        %v586 = vshrl.u32 %v585, 7
        %v587 = vsub.s32 %v392, %v586
        %v588 = vrot.slane %v326, %v587
        %v589 = vsel %vm397, %v588, %v584
        %v590 = vlaneseq
        %v591 = vshrl.u32 %v590, 7
        %v592 = vsub.s32 %v373, %v591
        %v593 = vrot.slane %v328, %v592
        %v594 = vlaneseq
        %v595 = vshrl.u32 %v594, 7
        %v596 = vsub.s32 %v378, %v595
        %v597 = vrot.slane %v330, %v596
        %v598 = vsel %vm383, %v597, %v593
        %v599 = vlaneseq
        %v600 = vshrl.u32 %v599, 7
        %v601 = vsub.s32 %v385, %v600
        %v602 = vrot.slane %v332, %v601
        %v603 = vsel %vm390, %v602, %v598
        %v604 = vlaneseq
        %v605 = vshrl.u32 %v604, 7
        %v606 = vsub.s32 %v392, %v605
        %v607 = vrot.slane %v334, %v606
        %v608 = vsel %vm397, %v607, %v603
        %v609 = vlaneseq
        %v610 = vshrl.u32 %v609, 7
        %v611 = vsub.s32 %v373, %v610
        %v612 = vrot.slane %v336, %v611
        %v613 = vlaneseq
        %v614 = vshrl.u32 %v613, 7
        %v615 = vsub.s32 %v378, %v614
        %v616 = vrot.slane %v338, %v615
        %v617 = vsel %vm383, %v616, %v612
        %v618 = vlaneseq
        %v619 = vshrl.u32 %v618, 7
        %v620 = vsub.s32 %v385, %v619
        %v621 = vrot.slane %v340, %v620
        %v622 = vsel %vm390, %v621, %v617
        %v623 = vlaneseq
        %v624 = vshrl.u32 %v623, 7
        %v625 = vsub.s32 %v392, %v624
        %v626 = vrot.slane %v342, %v625
        %v627 = vsel %vm397, %v626, %v622
        %v628 = vsel %vm456, %v589, %v570
        %v629 = vsel %vm458, %v608, %v628
        %v630 = vsel %vm460, %v627, %v629
        %v631 = vsel %vm462, %v630, 0
        %633 = vmatprep.subr.mxu0 0.0
        %634 = vmatpush1.msra.mxu0 %v343
        %635 = vmatprep.subr.mxu0 0.0
        %636 = vmatpush1.msra.mxu0 %v344
        %637 = vmatprep.subr.mxu0 0.0
        %638 = vmatpush1.msra.mxu0 %v345
        %639 = vmatprep.subr.mxu0 0.0
        %640 = vmatpush1.msra.mxu0 %v346
        %641 = vmatprep.subr.mxu0 0.0
        %642 = vmatpush1.msra.mxu0 0.0
        %643 = vmatprep.subr.mxu0 0.0
        %644 = vmatpush1.msra.mxu0 0.0
        %645 = vmatprep.subr.mxu0 0.0
        %646 = vmatpush1.msra.mxu0 0.0
        %647 = vmatprep.subr.mxu0 0.0
        %648 = vmatpush1.msra.mxu0 0.0
        %649 = vmatprep.subr.mxu0 0.0
        %650 = vmatpush1.msra.mxu0 0.0
        %651 = vmatprep.subr.mxu0 0.0
        %652 = vmatpush1.msra.mxu0 0.0
        %653 = vmatprep.subr.mxu0 0.0
        %654 = vmatpush1.msra.mxu0 0.0
        %655 = vmatprep.subr.mxu0 0.0
        %656 = vmatpush1.msra.mxu0 0.0
        %657 = vmatprep.subr.mxu0 0.0
        %658 = vmatpush1.msra.mxu0 0.0
        %659 = vmatprep.subr.mxu0 0.0
        %660 = vmatpush1.msra.mxu0 0.0
        %661 = vmatprep.subr.mxu0 0.0
        %662 = vmatpush1.msra.mxu0 0.0
        %663 = vmatprep.subr.mxu0 0.0
        %664 = vmatpush1.msra.mxu0 0.0
        %665 = vmatprep.subr.mxu0 0.0
        %666 = vmatpush1.msra.mxu0 0.0
        %667 = vmatprep.subr.mxu0 0.0
        %668 = vmatpush1.msra.mxu0 0.0
        %669 = vmatprep.subr.mxu0 0.0
        %670 = vmatpush1.msra.mxu0 0.0
        %671 = vmatprep.subr.mxu0 0.0
        %672 = vmatpush1.msra.mxu0 0.0
        %673 = vmatprep.subr.mxu0 0.0
        %674 = vmatpush1.msra.mxu0 0.0
        %675 = vmatprep.subr.mxu0 0.0
        %676 = vmatpush1.msra.mxu0 0.0
        %677 = vmatprep.subr.mxu0 0.0
        %678 = vmatpush1.msra.mxu0 0.0
        %679 = vmatprep.subr.mxu0 0.0
        %680 = vmatpush1.msra.mxu0 0.0
        %681 = vmatprep.subr.mxu0 0.0
        %682 = vmatpush1.msra.mxu0 0.0
        %683 = vmatprep.subr.mxu0 0.0
        %684 = vmatpush1.msra.mxu0 0.0
        %685 = vmatprep.subr.mxu0 0.0
        %686 = vmatpush1.msra.mxu0 0.0
        %687 = vmatprep.subr.mxu0 0.0
        %688 = vmatpush1.msra.mxu0 0.0
        %689 = vmatprep.subr.mxu0 0.0
        %690 = vmatpush1.msra.mxu0 0.0
        %691 = vmatprep.subr.mxu0 0.0
        %692 = vmatpush1.msra.mxu0 0.0
        %693 = vmatprep.subr.mxu0 0.0
        %694 = vmatpush1.msra.mxu0 0.0
        %695 = vmatprep.subr.mxu0 0.0
        %696 = vmatpush1.msra.mxu0 0.0
        %697 = vmatprep.mubr.f32.mxu0 0.0
        %698 = vmatmul.mubr.f32.gmra.mrb[0].mxu0 %v631
        %v699 = vpop.f32.mrb[0].mxu0
        %v700 = vadd.f32 %v354, %v699
        %v701 = vpop.f32.mrb[0].mxu0
        %702 = vdwg.mxu0
        %v703 = vmax.f32 %v700, 0.0
        %v704 = vadd.f32 %v535, %v703
        %v705 = vmul.f32 %v349, 2.0
        %v707 = vlaneseq
        %v708 = vshrl.u32 %v707, 7
        %v709 = vsub.s32 0, %v708
        %v710 = vrot.slane %v705, %v709
        %vm712 = vcmask 15360
        %v714 = vsel %vm712, %v704, 0
        %vm716 = vcmask 1041408
        %v718 = vsel %vm716, %v348, 0
        %720 = vmatprep.subr.mxu0 0.0
        %721 = vmatpush1.msra.mxu0 %v718
        %722 = vmatprep.subr.mxu0 0.0
        %723 = vmatpush1.msra.mxu0 0.0
        %724 = vmatprep.subr.mxu0 0.0
        %725 = vmatpush1.msra.mxu0 0.0
        %726 = vmatprep.subr.mxu0 0.0
        %727 = vmatpush1.msra.mxu0 0.0
        %728 = vmatprep.subr.mxu0 0.0
        %729 = vmatpush1.msra.mxu0 0.0
        %730 = vmatprep.subr.mxu0 0.0
        %731 = vmatpush1.msra.mxu0 0.0
        %732 = vmatprep.subr.mxu0 0.0
        %733 = vmatpush1.msra.mxu0 0.0
        %734 = vmatprep.subr.mxu0 0.0
        %735 = vmatpush1.msra.mxu0 0.0
        %736 = vmatprep.subr.mxu0 0.0
        %737 = vmatpush1.msra.mxu0 0.0
        %738 = vmatprep.subr.mxu0 0.0
        %739 = vmatpush1.msra.mxu0 0.0
        %740 = vmatprep.subr.mxu0 0.0
        %741 = vmatpush1.msra.mxu0 0.0
        %742 = vmatprep.subr.mxu0 0.0
        %743 = vmatpush1.msra.mxu0 0.0
        %744 = vmatprep.subr.mxu0 0.0
        %745 = vmatpush1.msra.mxu0 0.0
        %746 = vmatprep.subr.mxu0 0.0
        %747 = vmatpush1.msra.mxu0 0.0
        %748 = vmatprep.subr.mxu0 0.0
        %749 = vmatpush1.msra.mxu0 0.0
        %750 = vmatprep.subr.mxu0 0.0
        %751 = vmatpush1.msra.mxu0 0.0
        %752 = vmatprep.subr.mxu0 0.0
        %753 = vmatpush1.msra.mxu0 0.0
        %754 = vmatprep.subr.mxu0 0.0
        %755 = vmatpush1.msra.mxu0 0.0
        %756 = vmatprep.subr.mxu0 0.0
        %757 = vmatpush1.msra.mxu0 0.0
        %758 = vmatprep.subr.mxu0 0.0
        %759 = vmatpush1.msra.mxu0 0.0
        %760 = vmatprep.subr.mxu0 0.0
        %761 = vmatpush1.msra.mxu0 0.0
        %762 = vmatprep.subr.mxu0 0.0
        %763 = vmatpush1.msra.mxu0 0.0
        %764 = vmatprep.subr.mxu0 0.0
        %765 = vmatpush1.msra.mxu0 0.0
        %766 = vmatprep.subr.mxu0 0.0
        %767 = vmatpush1.msra.mxu0 0.0
        %768 = vmatprep.subr.mxu0 0.0
        %769 = vmatpush1.msra.mxu0 0.0
        %770 = vmatprep.subr.mxu0 0.0
        %771 = vmatpush1.msra.mxu0 0.0
        %772 = vmatprep.subr.mxu0 0.0
        %773 = vmatpush1.msra.mxu0 0.0
        %774 = vmatprep.subr.mxu0 0.0
        %775 = vmatpush1.msra.mxu0 0.0
        %776 = vmatprep.subr.mxu0 0.0
        %777 = vmatpush1.msra.mxu0 0.0
        %778 = vmatprep.subr.mxu0 0.0
        %779 = vmatpush1.msra.mxu0 0.0
        %780 = vmatprep.subr.mxu0 0.0
        %781 = vmatpush1.msra.mxu0 0.0
        %782 = vmatprep.subr.mxu0 0.0
        %783 = vmatpush1.msra.mxu0 0.0
        %784 = vmatprep.mubr.f32.mxu0 0.0
        %785 = vmatmul.mubr.f32.gmra.mrb[0].mxu0 %v714
        %v786 = vpop.f32.mrb[0].mxu0
        %v787 = vadd.f32 %v710, %v786
        %v788 = vpop.f32.mrb[0].mxu0
        %789 = vdwg.mxu0
        %v790 = vxor.u32 %v787, 2147483648
        %v791 = vmul.f32 %v790, 1.442695
        %v792 = vpow.pop %v791
        %v793 = vadd.f32 %v792, 1.0
        %v794 = vrcp.pop %v793
        %v795 = vmul.f32 1.0, %v794
        %v796 = vlaneseq
        %v797 = vshrl.u32 %v796, 7
        %v798 = vsub.s32 0, %v797
        %v799 = vrot.slane %v795, %v798
        %801 = vbcast.lane.b32.xlu0 %v799, 256
        %v802 = vpop.permute.xlu0 %801
        %s804 = sor.u32 256, 8
        %805 = vbcast.lane.b32.xlu0 %v799, %s804
        %v806 = vpop.permute.xlu0 %805
        %s808 = sor.u32 256, 16
        %809 = vbcast.lane.b32.xlu0 %v799, %s808
        %v810 = vpop.permute.xlu0 %809
        %s812 = sor.u32 256, 24
        %813 = vbcast.lane.b32.xlu0 %v799, %s812
        %v814 = vpop.permute.xlu0 %813
        %v815 = vlaneseq
        %v816 = vshrl.u32 %v815, 7
        %v817 = vsub.s32 1, %v816
        %v818 = vrot.slane %v795, %v817
        %820 = vbcast.lane.b32.xlu0 %v818, 256
        %v821 = vpop.permute.xlu0 %820
        %s823 = sor.u32 256, 8
        %824 = vbcast.lane.b32.xlu0 %v818, %s823
        %v825 = vpop.permute.xlu0 %824
        %s827 = sor.u32 256, 16
        %828 = vbcast.lane.b32.xlu0 %v818, %s827
        %v829 = vpop.permute.xlu0 %828
        %s831 = sor.u32 256, 24
        %832 = vbcast.lane.b32.xlu0 %v818, %s831
        %v833 = vpop.permute.xlu0 %832
        %v834 = vlaneseq
        %v835 = vshrl.u32 %v834, 7
        %v836 = vsub.s32 2, %v835
        %v837 = vrot.slane %v795, %v836
        %839 = vbcast.lane.b32.xlu0 %v837, 256
        %v840 = vpop.permute.xlu0 %839
        %s842 = sor.u32 256, 8
        %843 = vbcast.lane.b32.xlu0 %v837, %s842
        %v844 = vpop.permute.xlu0 %843
        %s846 = sor.u32 256, 16
        %847 = vbcast.lane.b32.xlu0 %v837, %s846
        %v848 = vpop.permute.xlu0 %847
        %s850 = sor.u32 256, 24
        %851 = vbcast.lane.b32.xlu0 %v837, %s850
        %v852 = vpop.permute.xlu0 %851
        %v853 = vlaneseq
        %v854 = vshrl.u32 %v853, 7
        %v855 = vsub.s32 3, %v854
        %v856 = vrot.slane %v795, %v855
        %858 = vbcast.lane.b32.xlu0 %v856, 256
        %v859 = vpop.permute.xlu0 %858
        %s861 = sor.u32 256, 8
        %862 = vbcast.lane.b32.xlu0 %v856, %s861
        %v863 = vpop.permute.xlu0 %862
        %s865 = sor.u32 256, 16
        %866 = vbcast.lane.b32.xlu0 %v856, %s865
        %v867 = vpop.permute.xlu0 %866
        %s869 = sor.u32 256, 24
        %870 = vbcast.lane.b32.xlu0 %v856, %s869
        %v871 = vpop.permute.xlu0 %870
        %v872 = vmul.f32 %v802, %v246
        %v873 = vmul.f32 %v806, %v247
        %v874 = vmul.f32 %v810, %v248
        %v875 = vmul.f32 %v814, %v249
        %v876 = vmul.f32 %v821, %v250
        %v877 = vmul.f32 %v825, %v251
        %v878 = vmul.f32 %v829, %v252
        %v879 = vmul.f32 %v833, %v253
        %v880 = vmul.f32 %v840, %v254
        %v881 = vmul.f32 %v844, %v255
        %v882 = vmul.f32 %v848, %v256
        %v883 = vmul.f32 %v852, %v257
        %v884 = vmul.f32 %v859, %v258
        %v885 = vmul.f32 %v863, %v259
        %v886 = vmul.f32 %v867, %v260
        %v887 = vmul.f32 %v871, %v261
        %888 = vst [vmem:[%s243] sm:$0xff] %v872
        %889 = vst [vmem:[%s243 + $0x8] sm:$0xff] %v873
        %890 = vst [vmem:[%s243 + $0x10] sm:$0xff] %v874
        %891 = vst [vmem:[%s243 + $0x18] sm:$0xff] %v875
        %892 = vst [vmem:[%s243 + $0x20] sm:$0xff] %v876
        %893 = vst [vmem:[%s243 + $0x28] sm:$0xff] %v877
        %894 = vst [vmem:[%s243 + $0x30] sm:$0xff] %v878
        %895 = vst [vmem:[%s243 + $0x38] sm:$0xff] %v879
        %896 = vst [vmem:[%s243 + $0x40] sm:$0xff] %v880
        %897 = vst [vmem:[%s243 + $0x48] sm:$0xff] %v881
        %898 = vst [vmem:[%s243 + $0x50] sm:$0xff] %v882
        %899 = vst [vmem:[%s243 + $0x58] sm:$0xff] %v883
        %900 = vst [vmem:[%s243 + $0x60] sm:$0xff] %v884
        %901 = vst [vmem:[%s243 + $0x68] sm:$0xff] %v885
        %902 = vst [vmem:[%s243 + $0x70] sm:$0xff] %v886
        %903 = vst [vmem:[%s243 + $0x78] sm:$0xff] %v887
        %s904 = sand.u32 %s140, 1
        %s905 = scalar_lea.sflag [#allocation4], %s904
        %s906 = sand.u32 %s140, 1
        %s907 = smul.addr %s906, 128
        %s908 = scalar_lea.vmem [#allocation5], %s907
        // Predicated region
        $region45: #{tpu_custom_call.1} parent=39 // pred_check
          %p909 = pneg %p150
        $region46: #{tpu_custom_call.1} parent=39 // pred_check_branch
          %911 = sbr.rel (%p909) target = $region48
        $region47: #{tpu_custom_call.1} parent=39 // pred_region
          %s912 = smul.u32 4, %s22
          %s914 = ssub.s32 2048, 2048
          %915 = vsyncadd %s905, %s914
          %s916 = smul.addr %s912, 4
          %s917 = smul.addr %s916, 128
          %s918 = scalar_lea.hbm %s5, %s917
          %s919 = sshll.u32 %s908, 4
          %s920 = int_to_ptr.vmem [resolvable:$true] %s919
          %925 = dma.vmem_to_hbm [thread:$0]  %s920, 2048, %s918, %s905, 128, 128, 8
        $region48: #{tpu_custom_call.1} parent=39 // pred_fallthru
          _
      $region40: #{tpu_custom_call.1} parent=5 // pred_fallthru
        _
      %p926 = scmp.le.s32.totalorder 2, %s17
      // Predicated region
      $region49: #{tpu_custom_call.1} parent=5 // pred_check
        %p927 = pneg %p926
      $region50: #{tpu_custom_call.1} parent=5 // pred_check_branch
        %929 = sbr.rel (%p927) target = $region52
      $region51: #{tpu_custom_call.1} parent=5 // pred_region
        %s930 = ssub.s32 %s17, 2
        // Predicated region
        $region53: #{tpu_custom_call.1} parent=51 // pred_check
          %p931 = pneg %p156
        $region54: #{tpu_custom_call.1} parent=51 // pred_check_branch
          %933 = sbr.rel (%p931) target = $region56
        $region55: #{tpu_custom_call.1} parent=51 // pred_region
          %s934 = sand.u32 %s141, 1
          %s935 = scalar_lea.sflag [#allocation4], %s934
          %s936 = sand.u32 %s141, 1
          %s937 = smul.addr %s936, 128
          %s938 = scalar_lea.vmem [#allocation5], %s937
          %939 = dma.done %s935, 2048
        $region56: #{tpu_custom_call.1} parent=51 // pred_fallthru
          _
      $region52: #{tpu_custom_call.1} parent=5 // pred_fallthru
        _
    $region6: #{tpu_custom_call.1} parent=1 // loop_footer
      %s21 = sadd.s32 1, %s17
    $region7: #{tpu_custom_call.1} parent=1 // loop_footer_branch
      %16 = sbr.rel target = $region3
    $region8: #{tpu_custom_call.1} parent=1 // loop_exit
      _
    %940 = vsyncpa [#allocation3], 1
    %s941 = scalar_lea.sflag [#allocation3], 1
    %942 = vsyncpa %s941, 1
    %943 = vsyncpa [#allocation4], 1
    %s944 = scalar_lea.sflag [#allocation4], 1
    %945 = vsyncpa %s944, 1

</llo_original>
